<compile_context>
chip_gen: v7x
topology: tpu7x:2x2x1
jax: 0.10.0
libtpu: 0.0.40
codegen_flags: <defaults>
</compile_context>

<pallas_src>
import functools

import jax
import jax.numpy as jnp
from jax.experimental import pallas as pl
from jax.experimental.pallas import tpu as pltpu


# ----------------------------- kernels --------------------------------------


def _conv_one_sample(x_ref, w_ref, g, *, hw, dhw):
    """3-tap temporal conv for sample `g` of the current block.

    x_ref : [G, Cin, (D+2)*HW]  padded per-sample slabs (VMEM block)
    w_ref : [3, Cout, Cin]      conv weight, tap-major
    returns y : [Cout, D*HW] f32
    """
    acc = None
    for k in range(3):  # static unroll; tap windows are static lane offsets
        xk = x_ref[g, :, k * hw:k * hw + dhw]            # [Cin, D*HW]
        yk = jnp.dot(w_ref[k], xk, preferred_element_type=jnp.float32)
        acc = yk if acc is None else acc + yk
    return acc


def _stats_kernel(x_ref, w_ref, stats_ref, *, g_per_block, hw, dhw):
    """Pass 1: per-block BN partial statistics of the conv output (y not written)."""
    ssum = None
    ssq = None
    for g in range(g_per_block):
        y = _conv_one_sample(x_ref, w_ref, g, hw=hw, dhw=dhw)
        s = jnp.sum(y, axis=1, keepdims=True)            # [Cout, 1]
        q = jnp.sum(y * y, axis=1, keepdims=True)        # [Cout, 1]
        ssum = s if ssum is None else ssum + s
        ssq = q if ssq is None else ssq + q
    stats_ref[0] = jnp.concatenate([ssum, ssq], axis=1)  # [Cout, 2]


def _conv_bn_relu_kernel(x_ref, w_ref, scale_ref, shift_ref, o_ref, *,
                         g_per_block, hw, dhw):
    """Pass 2: conv recomputed and fused with the folded BN FMA + ReLU."""
    scale = scale_ref[...]                               # [Cout, 1]
    shift = shift_ref[...]                               # [Cout, 1]
    for g in range(g_per_block):
        y = _conv_one_sample(x_ref, w_ref, g, hw=hw, dhw=dhw)
        o_ref[g] = jnp.maximum(y * scale + shift, 0.0).astype(o_ref.dtype)


# ----------------------------- wrapper ---------------------------------------


def _vmem_capacity_bytes():
    try:
        return int(pltpu.get_tpu_info().vmem_capacity_bytes)
    except Exception:
        return 64 * 1024 * 1024  # conservative default (v7x per-TC VMEM)


def _samples_per_block(n, per_sample_bytes, block_budget):
    """Largest divisor of n whose block fits the budget; keep >=2 grid steps."""
    g_cap = max(1, int(block_budget // max(per_sample_bytes, 1)))
    g_cap = min(g_cap, 16)                 # bound the static in-kernel unroll
    if n >= 2:
        g_cap = min(g_cap, max(1, n // 2))  # >=2 steps -> both v7x TensorCores
    g = 1
    for cand in range(1, n + 1):
        if cand <= g_cap and n % cand == 0:
            g = cand
    return g


def position_transformer_forward(x, conv_weight, conv_bias, bn_gamma, bn_beta,
                                 *, eps=1e-5):
    """x: [N, C_in, D, H, W] (NCDHW). Returns [N, C_out, D, H, W]."""
    N, Cin, D, H, W = x.shape
    Cout = conv_weight.shape[0]
    HW = H * W
    DHW = D * HW
    Lp = (D + 2) * HW
    M = N * DHW  # BN count per channel

    # ---- layout glue: pad D once; per-sample slab = [Cin, (D+2)*HW] ---------
    x4 = x.reshape(N, Cin, D, HW).astype(jnp.float32)
    x_slab = jnp.pad(x4, ((0, 0), (0, 0), (1, 1), (0, 0))).reshape(N, Cin, Lp)

    # PyTorch conv3d weight [Cout, Cin, 3, 1, 1] -> tap-major [3, Cout, Cin].
    w3 = jnp.transpose(conv_weight[:, :, :, 0, 0], (2, 0, 1)).astype(jnp.float32)

    # conv_bias intentionally unused: training-mode BatchNorm subtracts the
    # per-channel batch mean, which cancels a per-channel additive bias.
    del conv_bias

    # ---- chip-aware block sizing --------------------------------------------
    vmem_cap = _vmem_capacity_bytes()
    block_budget = vmem_cap // 4                      # headroom for pipelining
    per_sample = (Cin * Lp + Cout * DHW) * 4 * 2      # f32, double-buffered
    G = _samples_per_block(N, per_sample, block_budget)
    nb = N // G
    cparams = pltpu.CompilerParams(
        dimension_semantics=("parallel",),
        vmem_limit_bytes=int(min(vmem_cap * 3 // 4, 100 * 1024 * 1024)),
    )
    kw = dict(g_per_block=G, hw=HW, dhw=DHW)

    # ---- pass 1: conv -> per-block (sum, sum_sq) partials (tiny outputs) ----
    partials = pl.pallas_call(
        functools.partial(_stats_kernel, **kw),
        out_shape=jax.ShapeDtypeStruct((nb, Cout, 2), jnp.float32),
        grid=(nb,),
        in_specs=[
            pl.BlockSpec((G, Cin, Lp), lambda i: (i, 0, 0)),
            pl.BlockSpec((3, Cout, Cin), lambda i: (0, 0, 0)),
        ],
        out_specs=pl.BlockSpec((1, Cout, 2), lambda i: (i, 0, 0)),
        compiler_params=cparams,
    )(x_slab, w3)

    # ---- tiny XLA reduce: fold BN + affine into one per-channel scale/shift -
    totals = jnp.sum(partials, axis=0)                         # [Cout, 2]
    mean = totals[:, 0] / M
    # Single-pass variance; clamp tiny negatives from f32 cancellation.
    var = jnp.maximum(totals[:, 1] / M - mean * mean, 0.0)     # biased, as in PyTorch BN
    scale = (bn_gamma.astype(jnp.float32) * jax.lax.rsqrt(var + eps))
    shift = bn_beta.astype(jnp.float32) - mean * scale
    scale = scale.reshape(Cout, 1)
    shift = shift.reshape(Cout, 1)

    # ---- pass 2: conv + BN FMA + ReLU, streamed directly in final layout ----
    out3 = pl.pallas_call(
        functools.partial(_conv_bn_relu_kernel, **kw),
        out_shape=jax.ShapeDtypeStruct((N, Cout, DHW), x.dtype),
        grid=(nb,),
        in_specs=[
            pl.BlockSpec((G, Cin, Lp), lambda i: (i, 0, 0)),
            pl.BlockSpec((3, Cout, Cin), lambda i: (0, 0, 0)),
            pl.BlockSpec((Cout, 1), lambda i: (0, 0)),
            pl.BlockSpec((Cout, 1), lambda i: (0, 0)),
        ],
        out_specs=pl.BlockSpec((G, Cout, DHW), lambda i: (i, 0, 0)),
        compiler_params=cparams,
    )(x_slab, w3, scale, shift)

    # Free, layout-preserving reshape back to NCDHW (no transpose needed).
    return out3.reshape(N, Cout, D, H, W)


# ----------------------------- self-test -------------------------------------


if __name__ == "__main__":
    # Small shapes consistent with a Conv3d over landmark-position tensors.
    N, Cin, Cout, D, H, W = 2, 4, 8, 8, 4, 4

    key = jax.random.PRNGKey(0)
    kx, kw_, kb, kg, kbb, kemb = jax.random.split(key, 6)

    x = jax.random.normal(kx, (N, Cin, D, H, W), dtype=jnp.float32)
    conv_weight = jax.random.normal(kw_, (Cout, Cin, 3, 1, 1), dtype=jnp.float32) * 0.1
    conv_bias = jax.random.normal(kb, (Cout,), dtype=jnp.float32) * 0.1
    bn_gamma = 1.0 + 0.1 * jax.random.normal(kg, (Cout,), dtype=jnp.float32)
    bn_beta = 0.1 * jax.random.normal(kbb, (Cout,), dtype=jnp.float32)
    # Unused-in-forward parameter (kept for parity with __init__, never read):
    row_embed = jax.random.uniform(kemb, (300, Cin), dtype=jnp.float32)  # noqa: F841

    y = jax.jit(position_transformer_forward)(
        x, conv_weight, conv_bias, bn_gamma, bn_beta)
    jax.block_until_ready(y)
    assert y.shape == (N, Cout, D, H, W), y.shape

    # Pure-JAX reference (includes the conv bias, demonstrating it cancels).
    xpad = jnp.pad(x, ((0, 0), (0, 0), (1, 1), (0, 0), (0, 0)))
    conv = sum(jnp.einsum("ncdhw,oc->nodhw", xpad[:, :, k:k + D],
                          conv_weight[:, :, k, 0, 0]) for k in range(3))
    conv = conv + conv_bias[None, :, None, None, None]
    mu = conv.mean(axis=(0, 2, 3, 4), keepdims=True)
    var = conv.var(axis=(0, 2, 3, 4), keepdims=True)  # biased, like PyTorch BN
    ref = jnp.maximum(
        bn_gamma[None, :, None, None, None] * (conv - mu) / jnp.sqrt(var + 1e-5)
        + bn_beta[None, :, None, None, None], 0.0)
    err = float(jnp.max(jnp.abs(y - ref)))
    assert err < 2e-3, f"max abs error vs reference: {err}"

    print("KERNEL_OK")
</pallas_src>

<mosaic_0001>
module attributes {stable_mosaic.version = 11 : i64} {
  func.func @_stats_kernel(%arg0: i32, %arg1: memref<1x4x160xf32, #tpu.memory_space<vmem>>, %arg2: memref<3x8x4xf32, #tpu.memory_space<vmem>>, %arg3: memref<1x8x2xf32, #tpu.memory_space<vmem>>) attributes {dimension_semantics = [#tpu.dimension_semantics<parallel>], iteration_bounds = array<i64: 2>, scalar_prefetch = 0 : i64, scratch_operands = 0 : i64, tpu.core_type = #tpu.core_type<tc>, window_params = [{transform_indices = @transform_0, window_bounds = array<i64: 1, 4, 160>}, {pipeline_mode = #tpu.pipeline_mode<synchronous>, transform_indices = @transform_1, window_bounds = array<i64: 3, 8, 4>}, {transform_indices = @transform_2, window_bounds = array<i64: 1, 8, 2>}]} {
    %c0 = arith.constant 0 : index
    %c0_0 = arith.constant 0 : index
    %c0_1 = arith.constant 0 : index
    %0 = vector.load %arg1[%c0, %c0_0, %c0_1] : memref<1x4x160xf32, #tpu.memory_space<vmem>>, vector<1x4x128xf32>
    %1 = vector.shape_cast %0 : vector<1x4x128xf32> to vector<4x128xf32>
    %c0_2 = arith.constant 0 : index
    %c0_3 = arith.constant 0 : index
    %c0_4 = arith.constant 0 : index
    %2 = vector.load %arg2[%c0_2, %c0_3, %c0_4] : memref<3x8x4xf32, #tpu.memory_space<vmem>>, vector<1x8x4xf32>
    %3 = vector.shape_cast %2 : vector<1x8x4xf32> to vector<8x4xf32>
    %cst = arith.constant dense<0.000000e+00> : vector<8x128xf32>
    %4 = tpu.matmul %3, %1, %cst {dimension_numbers = #tpu.dot_dimension_numbers<[1], [0], [0], [1], [0, 0, 1, 1], [], []>} : vector<8x4xf32>, vector<4x128xf32>, vector<8x128xf32> -> vector<8x128xf32>
    %c0_5 = arith.constant 0 : index
    %c0_6 = arith.constant 0 : index
    %c16 = arith.constant 16 : index
    %5 = vector.load %arg1[%c0_5, %c0_6, %c16] : memref<1x4x160xf32, #tpu.memory_space<vmem>>, vector<1x4x128xf32>
    %6 = vector.shape_cast %5 : vector<1x4x128xf32> to vector<4x128xf32>
    %c1 = arith.constant 1 : index
    %c0_7 = arith.constant 0 : index
    %c0_8 = arith.constant 0 : index
    %7 = vector.load %arg2[%c1, %c0_7, %c0_8] : memref<3x8x4xf32, #tpu.memory_space<vmem>>, vector<1x8x4xf32>
    %8 = vector.shape_cast %7 : vector<1x8x4xf32> to vector<8x4xf32>
    %cst_9 = arith.constant dense<0.000000e+00> : vector<8x128xf32>
    %9 = tpu.matmul %8, %6, %cst_9 {dimension_numbers = #tpu.dot_dimension_numbers<[1], [0], [0], [1], [0, 0, 1, 1], [], []>} : vector<8x4xf32>, vector<4x128xf32>, vector<8x128xf32> -> vector<8x128xf32>
    %10 = arith.addf %4, %9 : vector<8x128xf32>
    %c0_10 = arith.constant 0 : index
    %c0_11 = arith.constant 0 : index
    %c32 = arith.constant 32 : index
    %11 = vector.load %arg1[%c0_10, %c0_11, %c32] : memref<1x4x160xf32, #tpu.memory_space<vmem>>, vector<1x4x128xf32>
    %12 = vector.shape_cast %11 : vector<1x4x128xf32> to vector<4x128xf32>
    %c2 = arith.constant 2 : index
    %c0_12 = arith.constant 0 : index
    %c0_13 = arith.constant 0 : index
    %13 = vector.load %arg2[%c2, %c0_12, %c0_13] : memref<3x8x4xf32, #tpu.memory_space<vmem>>, vector<1x8x4xf32>
    %14 = vector.shape_cast %13 : vector<1x8x4xf32> to vector<8x4xf32>
    %cst_14 = arith.constant dense<0.000000e+00> : vector<8x128xf32>
    %15 = tpu.matmul %14, %12, %cst_14 {dimension_numbers = #tpu.dot_dimension_numbers<[1], [0], [0], [1], [0, 0, 1, 1], [], []>} : vector<8x4xf32>, vector<4x128xf32>, vector<8x128xf32> -> vector<8x128xf32>
    %16 = arith.addf %10, %15 : vector<8x128xf32>
    %cst_15 = arith.constant dense<0.000000e+00> : vector<8xf32>
    %17 = vector.multi_reduction <add>, %16, %cst_15 [1] : vector<8x128xf32> to vector<8xf32>
    %18 = vector.shape_cast %17 : vector<8xf32> to vector<8x1xf32>
    %19 = arith.mulf %16, %16 : vector<8x128xf32>
    %cst_16 = arith.constant dense<0.000000e+00> : vector<8xf32>
    %20 = vector.multi_reduction <add>, %19, %cst_16 [1] : vector<8x128xf32> to vector<8xf32>
    %21 = vector.shape_cast %20 : vector<8xf32> to vector<8x1xf32>
    %22 = tpu.concatenate %18, %21 in 1 : vector<8x1xf32>, vector<8x1xf32> -> vector<8x2xf32>
    %c0_17 = arith.constant 0 : index
    %c0_18 = arith.constant 0 : index
    %c0_19 = arith.constant 0 : index
    %23 = vector.load %arg3[%c0_17, %c0_18, %c0_19] : memref<1x8x2xf32, #tpu.memory_space<vmem>>, vector<1x8x2xf32>
    %24 = vector.shape_cast %23 : vector<1x8x2xf32> to vector<8x2xf32>
    %25 = vector.shape_cast %22 : vector<8x2xf32> to vector<1x8x2xf32>
    tpu.vector_store %arg3[%c0_17, %c0_18, %c0_19], %25 {strides = array<i32>} : memref<1x8x2xf32, #tpu.memory_space<vmem>>, vector<1x8x2xf32>,
    return
  }
  func.func @transform_0(%arg0: i32) -> (i32, i32, i32) {
    %c0_i32 = arith.constant 0 : i32
    %c0_i32_0 = arith.constant 0 : i32
    %c0_i32_1 = arith.constant 0 : i32
    return %arg0, %c0_i32, %c0_i32_0 : i32, i32, i32
  }
  func.func @transform_1(%arg0: i32) -> (i32, i32, i32) {
    %c0_i32 = arith.constant 0 : i32
    %c0_i32_0 = arith.constant 0 : i32
    %c0_i32_1 = arith.constant 0 : i32
    %c0_i32_2 = arith.constant 0 : i32
    return %c0_i32, %c0_i32_0, %c0_i32_1 : i32, i32, i32
  }
  func.func @transform_2(%arg0: i32) -> (i32, i32, i32) {
    %c0_i32 = arith.constant 0 : i32
    %c0_i32_0 = arith.constant 0 : i32
    %c0_i32_1 = arith.constant 0 : i32
    return %arg0, %c0_i32, %c0_i32_0 : i32, i32, i32
  }
}

module attributes {stable_mosaic.version = 11 : i64} {
  func.func @_conv_bn_relu_kernel(%arg0: i32, %arg1: memref<1x4x160xf32, #tpu.memory_space<vmem>>, %arg2: memref<3x8x4xf32, #tpu.memory_space<vmem>>, %arg3: memref<8x1xf32, #tpu.memory_space<vmem>>, %arg4: memref<8x1xf32, #tpu.memory_space<vmem>>, %arg5: memref<1x8x128xf32, #tpu.memory_space<vmem>>) attributes {dimension_semantics = [#tpu.dimension_semantics<parallel>], iteration_bounds = array<i64: 2>, scalar_prefetch = 0 : i64, scratch_operands = 0 : i64, tpu.core_type = #tpu.core_type<tc>, window_params = [{transform_indices = @transform_0, window_bounds = array<i64: 1, 4, 160>}, {pipeline_mode = #tpu.pipeline_mode<synchronous>, transform_indices = @transform_1, window_bounds = array<i64: 3, 8, 4>}, {pipeline_mode = #tpu.pipeline_mode<synchronous>, transform_indices = @transform_2, window_bounds = array<i64: 8, 1>}, {pipeline_mode = #tpu.pipeline_mode<synchronous>, transform_indices = @transform_3, window_bounds = array<i64: 8, 1>}, {transform_indices = @transform_4, window_bounds = array<i64: 1, 8, 128>}]} {
    %c0 = arith.constant 0 : index
    %c0_0 = arith.constant 0 : index
    %0 = vector.load %arg3[%c0, %c0_0] : memref<8x1xf32, #tpu.memory_space<vmem>>, vector<8x1xf32>
    %c0_1 = arith.constant 0 : index
    %c0_2 = arith.constant 0 : index
    %1 = vector.load %arg4[%c0_1, %c0_2] : memref<8x1xf32, #tpu.memory_space<vmem>>, vector<8x1xf32>
    %c0_3 = arith.constant 0 : index
    %c0_4 = arith.constant 0 : index
    %c0_5 = arith.constant 0 : index
    %2 = vector.load %arg1[%c0_3, %c0_4, %c0_5] : memref<1x4x160xf32, #tpu.memory_space<vmem>>, vector<1x4x128xf32>
    %3 = vector.shape_cast %2 : vector<1x4x128xf32> to vector<4x128xf32>
    %c0_6 = arith.constant 0 : index
    %c0_7 = arith.constant 0 : index
    %c0_8 = arith.constant 0 : index
    %4 = vector.load %arg2[%c0_6, %c0_7, %c0_8] : memref<3x8x4xf32, #tpu.memory_space<vmem>>, vector<1x8x4xf32>
    %5 = vector.shape_cast %4 : vector<1x8x4xf32> to vector<8x4xf32>
    %cst = arith.constant dense<0.000000e+00> : vector<8x128xf32>
    %6 = tpu.matmul %5, %3, %cst {dimension_numbers = #tpu.dot_dimension_numbers<[1], [0], [0], [1], [0, 0, 1, 1], [], []>} : vector<8x4xf32>, vector<4x128xf32>, vector<8x128xf32> -> vector<8x128xf32>
    %c0_9 = arith.constant 0 : index
    %c0_10 = arith.constant 0 : index
    %c16 = arith.constant 16 : index
    %7 = vector.load %arg1[%c0_9, %c0_10, %c16] : memref<1x4x160xf32, #tpu.memory_space<vmem>>, vector<1x4x128xf32>
    %8 = vector.shape_cast %7 : vector<1x4x128xf32> to vector<4x128xf32>
    %c1 = arith.constant 1 : index
    %c0_11 = arith.constant 0 : index
    %c0_12 = arith.constant 0 : index
    %9 = vector.load %arg2[%c1, %c0_11, %c0_12] : memref<3x8x4xf32, #tpu.memory_space<vmem>>, vector<1x8x4xf32>
    %10 = vector.shape_cast %9 : vector<1x8x4xf32> to vector<8x4xf32>
    %cst_13 = arith.constant dense<0.000000e+00> : vector<8x128xf32>
    %11 = tpu.matmul %10, %8, %cst_13 {dimension_numbers = #tpu.dot_dimension_numbers<[1], [0], [0], [1], [0, 0, 1, 1], [], []>} : vector<8x4xf32>, vector<4x128xf32>, vector<8x128xf32> -> vector<8x128xf32>
    %12 = arith.addf %6, %11 : vector<8x128xf32>
    %c0_14 = arith.constant 0 : index
    %c0_15 = arith.constant 0 : index
    %c32 = arith.constant 32 : index
    %13 = vector.load %arg1[%c0_14, %c0_15, %c32] : memref<1x4x160xf32, #tpu.memory_space<vmem>>, vector<1x4x128xf32>
    %14 = vector.shape_cast %13 : vector<1x4x128xf32> to vector<4x128xf32>
    %c2 = arith.constant 2 : index
    %c0_16 = arith.constant 0 : index
    %c0_17 = arith.constant 0 : index
    %15 = vector.load %arg2[%c2, %c0_16, %c0_17] : memref<3x8x4xf32, #tpu.memory_space<vmem>>, vector<1x8x4xf32>
    %16 = vector.shape_cast %15 : vector<1x8x4xf32> to vector<8x4xf32>
    %cst_18 = arith.constant dense<0.000000e+00> : vector<8x128xf32>
    %17 = tpu.matmul %16, %14, %cst_18 {dimension_numbers = #tpu.dot_dimension_numbers<[1], [0], [0], [1], [0, 0, 1, 1], [], []>} : vector<8x4xf32>, vector<4x128xf32>, vector<8x128xf32> -> vector<8x128xf32>
    %18 = arith.addf %12, %17 : vector<8x128xf32>
    %19 = vector.broadcast %0 : vector<8x1xf32> to vector<8x128xf32>
    %20 = arith.mulf %18, %19 : vector<8x128xf32>
    %21 = vector.broadcast %1 : vector<8x1xf32> to vector<8x128xf32>
    %22 = arith.addf %20, %21 : vector<8x128xf32>
    %cst_19 = arith.constant 0.000000e+00 : f32
    %23 = vector.broadcast %cst_19 : f32 to vector<8x128xf32>
    %24 = arith.maximumf %22, %23 : vector<8x128xf32>
    %c0_20 = arith.constant 0 : index
    %c0_21 = arith.constant 0 : index
    %c0_22 = arith.constant 0 : index
    %25 = vector.load %arg5[%c0_20, %c0_21, %c0_22] : memref<1x8x128xf32, #tpu.memory_space<vmem>>, vector<1x8x128xf32>
    %26 = vector.shape_cast %25 : vector<1x8x128xf32> to vector<8x128xf32>
    %27 = vector.shape_cast %24 : vector<8x128xf32> to vector<1x8x128xf32>
    tpu.vector_store %arg5[%c0_20, %c0_21, %c0_22], %27 {strides = array<i32>} : memref<1x8x128xf32, #tpu.memory_space<vmem>>, vector<1x8x128xf32>,
    return
  }
  func.func @transform_0(%arg0: i32) -> (i32, i32, i32) {
    %c0_i32 = arith.constant 0 : i32
    %c0_i32_0 = arith.constant 0 : i32
    %c0_i32_1 = arith.constant 0 : i32
    return %arg0, %c0_i32, %c0_i32_0 : i32, i32, i32
  }
  func.func @transform_1(%arg0: i32) -> (i32, i32, i32) {
    %c0_i32 = arith.constant 0 : i32
    %c0_i32_0 = arith.constant 0 : i32
    %c0_i32_1 = arith.constant 0 : i32
    %c0_i32_2 = arith.constant 0 : i32
    return %c0_i32, %c0_i32_0, %c0_i32_1 : i32, i32, i32
  }
  func.func @transform_2(%arg0: i32) -> (i32, i32) {
    %c0_i32 = arith.constant 0 : i32
    %c0_i32_0 = arith.constant 0 : i32
    %c0_i32_1 = arith.constant 0 : i32
    return %c0_i32, %c0_i32_0 : i32, i32
  }
  func.func @transform_3(%arg0: i32) -> (i32, i32) {
    %c0_i32 = arith.constant 0 : i32
    %c0_i32_0 = arith.constant 0 : i32
    %c0_i32_1 = arith.constant 0 : i32
    return %c0_i32, %c0_i32_0 : i32, i32
  }
  func.func @transform_4(%arg0: i32) -> (i32, i32, i32) {
    %c0_i32 = arith.constant 0 : i32
    %c0_i32_0 = arith.constant 0 : i32
    %c0_i32_1 = arith.constant 0 : i32
    return %arg0, %c0_i32, %c0_i32_0 : i32, i32, i32
  }
}

</mosaic_0001>

<llo_original>
// kernel: position_transformer_forward.2
$region0: #{position_transformer_forward.2}
  #allocation0 [shape = 'u32[]', space=smem, size = 0x4, offset = 0x4, fixed_abs, tag = 'smem constant byte address 0x4 - core index']
  #allocation1 [shape = 'u32[144,128]{1,0:T(1,128)}', space=vmem, size = 0x12000, scoped, tag = 'internal scratch']
  %s0 = inlined_call_operand.vmem [shape: f32[2,4,160], index: 0, kind: input, shape index: {}]
  %s1 = inlined_call_operand.vmem [shape: f32[3,8,4], index: 1, kind: input, shape index: {}]
  %s2 = inlined_call_operand.vmem [shape: f32[2,8,2], index: 2, kind: output, shape index: {}]
  %s3 = sld [smem:[#allocation0]]
  $region41: #{position_transformer_forward.2} parent=0
    _
  %s5 = ssub.s32 1, %s3
  %s6 = scalar_select 0, %s5, %s3
  loop: start=0, step=1, limit=4
  $region2: #{position_transformer_forward.2} parent=0 // loop_pre_header
    _
  $region3: #{position_transformer_forward.2} parent=0 // loop_header
    %s8 = sphi 0, %s12
    %p9 = scmp.ge.s32.totalorder %s8, 4
    %s18 = sphi 0, %s20
    %s21 = sphi 0, %s18
    %s22 = sphi 0, %s21
    %s38 = sphi 0, %s22
    %s42 = sphi 0, %s42
    %s44 = sphi 0, %s42
    %s45 = sphi 0, %s44
    %s59 = sphi 0, %s45
    %s65 = sphi 0, %s67
    %s68 = sphi 0, %s65
    %s69 = sphi 0, %s68
    %s85 = sphi 0, %s69
  $region4: #{position_transformer_forward.2} parent=0 // loop_header_branch
    %11 = sbr.rel (%p9) target = $region8
  $region5: #{position_transformer_forward.2} parent=0 // loop_body
    %s13 = ssub.s32 %s8, 1
    %s14 = ssub.s32 %s8, 2
    %s15 = sadd.s32 %s8, 1
    %s16 = ssub.s32 %s8, %s15
    %p17 = scmp.eq.s32.totalorder %s16, 0
    %s19 = sadd.s32 %s18, 1
    %s20 = scalar_select %p17, %s18, %s19
    %p23 = pneg %p17
    %p24 = scmp.eq.s32.totalorder %s8, 1
    %p25 = por %p23, %p24
    %p26 = scmp.ne.s32.totalorder %s18, %s21
    %p27 = scmp.eq.s32.totalorder %s8, 0
    %p28 = por %p26, %p27
    %p29 = scmp.ne.s32.totalorder %s18, %s21
    %p30 = scmp.eq.s32.totalorder %s13, 1
    %p31 = por %p29, %p30
    %p32 = scmp.ne.s32.totalorder %s21, %s22
    %p33 = scmp.eq.s32.totalorder %s13, 0
    %p34 = por %p32, %p33
    %p35 = scmp.ne.s32.totalorder %s21, %s22
    %p36 = scmp.eq.s32.totalorder %s14, 1
    %p37 = por %p35, %p36
    %p39 = scmp.ne.s32.totalorder %s22, %s38
    %p40 = scmp.eq.s32.totalorder %s14, 0
    %p41 = por %p39, %p40
    %s43 = sadd.s32 %s42, 1
    %p46 = scmp.eq.s32.totalorder %s8, 1
    %p47 = scmp.ne.s32.totalorder %s42, %s44
    %p48 = scmp.eq.s32.totalorder %s8, 0
    %p49 = por %p47, %p48
    %p50 = scmp.ne.s32.totalorder %s42, %s44
    %p51 = scmp.eq.s32.totalorder %s13, 1
    %p52 = por %p50, %p51
    %p53 = scmp.ne.s32.totalorder %s44, %s45
    %p54 = scmp.eq.s32.totalorder %s13, 0
    %p55 = por %p53, %p54
    %p56 = scmp.ne.s32.totalorder %s44, %s45
    %p57 = scmp.eq.s32.totalorder %s14, 1
    %p58 = por %p56, %p57
    %p60 = scmp.ne.s32.totalorder %s45, %s59
    %p61 = scmp.eq.s32.totalorder %s14, 0
    %p62 = por %p60, %p61
    %s63 = ssub.s32 %s8, %s15
    %p64 = scmp.eq.s32.totalorder %s63, 0
    %s66 = sadd.s32 %s65, 1
    %s67 = scalar_select %p64, %s65, %s66
    %p70 = pneg %p64
    %p71 = scmp.eq.s32.totalorder %s8, 1
    %p72 = por %p70, %p71
    %p73 = scmp.ne.s32.totalorder %s65, %s68
    %p74 = scmp.eq.s32.totalorder %s8, 0
    %p75 = por %p73, %p74
    %p76 = scmp.ne.s32.totalorder %s65, %s68
    %p77 = scmp.eq.s32.totalorder %s13, 1
    %p78 = por %p76, %p77
    %p79 = scmp.ne.s32.totalorder %s68, %s69
    %p80 = scmp.eq.s32.totalorder %s13, 0
    %p81 = por %p79, %p80
    %p82 = scmp.ne.s32.totalorder %s68, %s69
    %p83 = scmp.eq.s32.totalorder %s14, 1
    %p84 = por %p82, %p83
    %p86 = scmp.ne.s32.totalorder %s69, %s85
    %p87 = scmp.eq.s32.totalorder %s14, 0
    %p88 = por %p86, %p87
    %p89 = scmp.le.s32.totalorder 1, %s8
    %p90 = scmp.lt.s32.totalorder %s8, 3
    %p91 = pnand %p89, %p90
    %p92 = pneg %p91
    // Predicated region
    $region9: #{position_transformer_forward.2} parent=5 // pred_check
      _
    $region10: #{position_transformer_forward.2} parent=5 // pred_check_branch
      %94 = sbr.rel (%p91) target = $region12
    $region11: #{position_transformer_forward.2} parent=5 // pred_region
      %s95 = ssub.s32 %s8, 1
      // Predicated region
      $region13: #{position_transformer_forward.2} parent=11 // pred_check
        %p96 = pneg %p55
      $region14: #{position_transformer_forward.2} parent=11 // pred_check_branch
        %98 = sbr.rel (%p96) target = $region16
      $region15: #{position_transformer_forward.2} parent=11 // pred_region
        _
      $region16: #{position_transformer_forward.2} parent=11 // pred_fallthru
        _
    $region12: #{position_transformer_forward.2} parent=5 // pred_fallthru
      _
    %p99 = scmp.lt.s32.totalorder %s8, 2
    // Predicated region
    $region17: #{position_transformer_forward.2} parent=5 // pred_check
      %p100 = pneg %p99
    $region18: #{position_transformer_forward.2} parent=5 // pred_check_branch
      %102 = sbr.rel (%p100) target = $region20
    $region19: #{position_transformer_forward.2} parent=5 // pred_region
      // Predicated region
      $region21: #{position_transformer_forward.2} parent=19 // pred_check
        %p103 = pneg %p28
      $region22: #{position_transformer_forward.2} parent=19 // pred_check_branch
        %105 = sbr.rel (%p103) target = $region24
      $region23: #{position_transformer_forward.2} parent=19 // pred_region
        %p106 = scmp.lt.s32.totalorder %s8, 1
        %s107 = scalar_select %p106, %s8, 1
        %s108 = smul.addr %s107, 2
        %s109 = smul.addr %s108, 4
        %s110 = scalar_lea.vmem %s0, %s109
      $region24: #{position_transformer_forward.2} parent=19 // pred_fallthru
        _
    $region20: #{position_transformer_forward.2} parent=5 // pred_fallthru
      _
    %p111 = scmp.le.s32.totalorder 1, %s8
    %p112 = scmp.lt.s32.totalorder %s8, 3
    %p113 = pnand %p111, %p112
    %p114 = pneg %p113
    // Predicated region
    $region25: #{position_transformer_forward.2} parent=5 // pred_check
      _
    $region26: #{position_transformer_forward.2} parent=5 // pred_check_branch
      %116 = sbr.rel (%p113) target = $region28
    $region27: #{position_transformer_forward.2} parent=5 // pred_region
      %s117 = ssub.s32 %s8, 1
      %p118 = scmp.lt.s32.totalorder %s13, 1
      %s119 = scalar_select %p118, %s13, 1
      %s120 = smul.addr %s119, 2
      %s121 = smul.addr %s120, 4
      %s122 = scalar_lea.vmem %s0, %s121
      %p123 = pneg %p34
      %p124 = pneg %p31
      %p125 = pneg %p55
      %p126 = pneg %p52
      %p127 = pneg %p81
      %p128 = pneg %p78
      %p129 = scmp.lt.s32.totalorder %s13, 1
      %s130 = scalar_select %p129, %s13, 1
      %s131 = smul.addr %s130, 8
      %s132 = scalar_lea.vmem %s2, %s131
      %p133 = scmp.lt.s32.totalorder %s13, 1
      %s134 = scalar_select %p133, %s13, 1
      %s135 = smul.addr %s134, 2
      %s136 = smul.addr %s135, 4
      %s137 = scalar_lea.vmem %s0, %s136
      %p138 = scmp.lt.s32.totalorder %s13, 1
      %s139 = scalar_select %p138, %s13, 1
      %s140 = smul.addr %s139, 8
      %s141 = scalar_lea.vmem %s2, %s140
      %v142 = vld [vmem:[%s137] sm:$0xf]
      %v143 = vld [vmem:[%s1] sm:$0xff]
      %v144 = vld [vmem:[%s137] sm:$0xff]
      %s145 = scalar_lea.vmem %s1, 8
      %v146 = vld [vmem:[%s145] sm:$0xff]
      %v148 = vcombine.high %v144, %v144
      %149 = vrot.lane.b32.xlu0 %v144, 112
      %v150 = vpop.permute.xlu0 %149
      %151 = vrot.lane.b32.xlu0 %v148, 112
      %v152 = vpop.permute.xlu0 %151
      %vm153 = vcmask 916480
      %v154 = vsel %vm153, %v150, %v152
      %vm155 = vcmask 31744
      %v157 = vsel %vm155, %v146, 0
      %vm159 = vcmask 1043456
      %v160 = vsel %vm159, %v154, 0
      %162 = vmatprep.subr.mxu0 0.0
      %163 = vmatpush1.msra.mxu0 %v160
      %164 = vmatprep.subr.mxu0 0.0
      %165 = vmatpush1.msra.mxu0 0.0
      %166 = vmatprep.subr.mxu0 0.0
      %167 = vmatpush1.msra.mxu0 0.0
      %168 = vmatprep.subr.mxu0 0.0
      %169 = vmatpush1.msra.mxu0 0.0
      %170 = vmatprep.subr.mxu0 0.0
      %171 = vmatpush1.msra.mxu0 0.0
      %172 = vmatprep.subr.mxu0 0.0
      %173 = vmatpush1.msra.mxu0 0.0
      %174 = vmatprep.subr.mxu0 0.0
      %175 = vmatpush1.msra.mxu0 0.0
      %176 = vmatprep.subr.mxu0 0.0
      %177 = vmatpush1.msra.mxu0 0.0
      %178 = vmatprep.subr.mxu0 0.0
      %179 = vmatpush1.msra.mxu0 0.0
      %180 = vmatprep.subr.mxu0 0.0
      %181 = vmatpush1.msra.mxu0 0.0
      %182 = vmatprep.subr.mxu0 0.0
      %183 = vmatpush1.msra.mxu0 0.0
      %184 = vmatprep.subr.mxu0 0.0
      %185 = vmatpush1.msra.mxu0 0.0
      %186 = vmatprep.subr.mxu0 0.0
      %187 = vmatpush1.msra.mxu0 0.0
      %188 = vmatprep.subr.mxu0 0.0
      %189 = vmatpush1.msra.mxu0 0.0
      %190 = vmatprep.subr.mxu0 0.0
      %191 = vmatpush1.msra.mxu0 0.0
      %192 = vmatprep.subr.mxu0 0.0
      %193 = vmatpush1.msra.mxu0 0.0
      %194 = vmatprep.subr.mxu0 0.0
      %195 = vmatpush1.msra.mxu0 0.0
      %196 = vmatprep.subr.mxu0 0.0
      %197 = vmatpush1.msra.mxu0 0.0
      %198 = vmatprep.subr.mxu0 0.0
      %199 = vmatpush1.msra.mxu0 0.0
      %200 = vmatprep.subr.mxu0 0.0
      %201 = vmatpush1.msra.mxu0 0.0
      %202 = vmatprep.subr.mxu0 0.0
      %203 = vmatpush1.msra.mxu0 0.0
      %204 = vmatprep.subr.mxu0 0.0
      %205 = vmatpush1.msra.mxu0 0.0
      %206 = vmatprep.subr.mxu0 0.0
      %207 = vmatpush1.msra.mxu0 0.0
      %208 = vmatprep.subr.mxu0 0.0
      %209 = vmatpush1.msra.mxu0 0.0
      %210 = vmatprep.subr.mxu0 0.0
      %211 = vmatpush1.msra.mxu0 0.0
      %212 = vmatprep.subr.mxu0 0.0
      %213 = vmatpush1.msra.mxu0 0.0
      %214 = vmatprep.subr.mxu0 0.0
      %215 = vmatpush1.msra.mxu0 0.0
      %216 = vmatprep.subr.mxu0 0.0
      %217 = vmatpush1.msra.mxu0 0.0
      %218 = vmatprep.subr.mxu0 0.0
      %219 = vmatpush1.msra.mxu0 0.0
      %220 = vmatprep.subr.mxu0 0.0
      %221 = vmatpush1.msra.mxu0 0.0
      %222 = vmatprep.subr.mxu0 0.0
      %223 = vmatpush1.msra.mxu0 0.0
      %224 = vmatprep.subr.mxu0 0.0
      %225 = vmatpush1.msra.mxu0 0.0
      %226 = vmatprep.mubr.f32.mxu0 0.0
      %227 = vmatmul.mubr.f32.gmra.mrb[0].mxu0 %v157
      %v228 = vpop.f32.mrb[0].mxu0
      %v229 = vadd.f32 0.0, %v228
      %v230 = vpop.f32.mrb[0].mxu0
      %231 = vdwg.mxu0
      %v233 = vsel %vm155, %v143, 0
      %v236 = vsel %vm159, %v142, 0
      %238 = vmatprep.subr.mxu0 0.0
      %239 = vmatpush1.msra.mxu0 %v236
      %240 = vmatprep.subr.mxu0 0.0
      %241 = vmatpush1.msra.mxu0 0.0
      %242 = vmatprep.subr.mxu0 0.0
      %243 = vmatpush1.msra.mxu0 0.0
      %244 = vmatprep.subr.mxu0 0.0
      %245 = vmatpush1.msra.mxu0 0.0
      %246 = vmatprep.subr.mxu0 0.0
      %247 = vmatpush1.msra.mxu0 0.0
      %248 = vmatprep.subr.mxu0 0.0
      %249 = vmatpush1.msra.mxu0 0.0
      %250 = vmatprep.subr.mxu0 0.0
      %251 = vmatpush1.msra.mxu0 0.0
      %252 = vmatprep.subr.mxu0 0.0
      %253 = vmatpush1.msra.mxu0 0.0
      %254 = vmatprep.subr.mxu0 0.0
      %255 = vmatpush1.msra.mxu0 0.0
      %256 = vmatprep.subr.mxu0 0.0
      %257 = vmatpush1.msra.mxu0 0.0
      %258 = vmatprep.subr.mxu0 0.0
      %259 = vmatpush1.msra.mxu0 0.0
      %260 = vmatprep.subr.mxu0 0.0
      %261 = vmatpush1.msra.mxu0 0.0
      %262 = vmatprep.subr.mxu0 0.0
      %263 = vmatpush1.msra.mxu0 0.0
      %264 = vmatprep.subr.mxu0 0.0
      %265 = vmatpush1.msra.mxu0 0.0
      %266 = vmatprep.subr.mxu0 0.0
      %267 = vmatpush1.msra.mxu0 0.0
      %268 = vmatprep.subr.mxu0 0.0
      %269 = vmatpush1.msra.mxu0 0.0
      %270 = vmatprep.subr.mxu0 0.0
      %271 = vmatpush1.msra.mxu0 0.0
      %272 = vmatprep.subr.mxu0 0.0
      %273 = vmatpush1.msra.mxu0 0.0
      %274 = vmatprep.subr.mxu0 0.0
      %275 = vmatpush1.msra.mxu0 0.0
      %276 = vmatprep.subr.mxu0 0.0
      %277 = vmatpush1.msra.mxu0 0.0
      %278 = vmatprep.subr.mxu0 0.0
      %279 = vmatpush1.msra.mxu0 0.0
      %280 = vmatprep.subr.mxu0 0.0
      %281 = vmatpush1.msra.mxu0 0.0
      %282 = vmatprep.subr.mxu0 0.0
      %283 = vmatpush1.msra.mxu0 0.0
      %284 = vmatprep.subr.mxu0 0.0
      %285 = vmatpush1.msra.mxu0 0.0
      %286 = vmatprep.subr.mxu0 0.0
      %287 = vmatpush1.msra.mxu0 0.0
      %288 = vmatprep.subr.mxu0 0.0
      %289 = vmatpush1.msra.mxu0 0.0
      %290 = vmatprep.subr.mxu0 0.0
      %291 = vmatpush1.msra.mxu0 0.0
      %292 = vmatprep.subr.mxu0 0.0
      %293 = vmatpush1.msra.mxu0 0.0
      %294 = vmatprep.subr.mxu0 0.0
      %295 = vmatpush1.msra.mxu0 0.0
      %296 = vmatprep.subr.mxu0 0.0
      %297 = vmatpush1.msra.mxu0 0.0
      %298 = vmatprep.subr.mxu0 0.0
      %299 = vmatpush1.msra.mxu0 0.0
      %300 = vmatprep.subr.mxu0 0.0
      %301 = vmatpush1.msra.mxu0 0.0
      %302 = vmatprep.mubr.f32.mxu0 0.0
      %303 = vmatmul.mubr.f32.gmra.mrb[0].mxu0 %v233
      %v304 = vpop.f32.mrb[0].mxu0
      %v305 = vadd.f32 %v229, %v304
      %v306 = vpop.f32.mrb[0].mxu0
      %307 = vdwg.mxu0
      %v308 = vld [vmem:[%s137] sm:$0xff]
      %s309 = scalar_lea.vmem %s1, 16
      %v310 = vld [vmem:[%s309] sm:$0xff]
      %v312 = vcombine.high %v308, %v308
      %313 = vrot.lane.b32.xlu0 %v308, 96
      %v314 = vpop.permute.xlu0 %313
      %315 = vrot.lane.b32.xlu0 %v312, 96
      %v316 = vpop.permute.xlu0 %315
      %vm317 = vcmask 785408
      %v318 = vsel %vm317, %v314, %v316
      %v320 = vsel %vm155, %v310, 0
      %v322 = vsel %vm159, %v318, 0
      %324 = vmatprep.subr.mxu0 0.0
      %325 = vmatpush1.msra.mxu0 %v322
      %326 = vmatprep.subr.mxu0 0.0
      %327 = vmatpush1.msra.mxu0 0.0
      %328 = vmatprep.subr.mxu0 0.0
      %329 = vmatpush1.msra.mxu0 0.0
      %330 = vmatprep.subr.mxu0 0.0
      %331 = vmatpush1.msra.mxu0 0.0
      %332 = vmatprep.subr.mxu0 0.0
      %333 = vmatpush1.msra.mxu0 0.0
      %334 = vmatprep.subr.mxu0 0.0
      %335 = vmatpush1.msra.mxu0 0.0
      %336 = vmatprep.subr.mxu0 0.0
      %337 = vmatpush1.msra.mxu0 0.0
      %338 = vmatprep.subr.mxu0 0.0
      %339 = vmatpush1.msra.mxu0 0.0
      %340 = vmatprep.subr.mxu0 0.0
      %341 = vmatpush1.msra.mxu0 0.0
      %342 = vmatprep.subr.mxu0 0.0
      %343 = vmatpush1.msra.mxu0 0.0
      %344 = vmatprep.subr.mxu0 0.0
      %345 = vmatpush1.msra.mxu0 0.0
      %346 = vmatprep.subr.mxu0 0.0
      %347 = vmatpush1.msra.mxu0 0.0
      %348 = vmatprep.subr.mxu0 0.0
      %349 = vmatpush1.msra.mxu0 0.0
      %350 = vmatprep.subr.mxu0 0.0
      %351 = vmatpush1.msra.mxu0 0.0
      %352 = vmatprep.subr.mxu0 0.0
      %353 = vmatpush1.msra.mxu0 0.0
      %354 = vmatprep.subr.mxu0 0.0
      %355 = vmatpush1.msra.mxu0 0.0
      %356 = vmatprep.subr.mxu0 0.0
      %357 = vmatpush1.msra.mxu0 0.0
      %358 = vmatprep.subr.mxu0 0.0
      %359 = vmatpush1.msra.mxu0 0.0
      %360 = vmatprep.subr.mxu0 0.0
      %361 = vmatpush1.msra.mxu0 0.0
      %362 = vmatprep.subr.mxu0 0.0
      %363 = vmatpush1.msra.mxu0 0.0
      %364 = vmatprep.subr.mxu0 0.0
      %365 = vmatpush1.msra.mxu0 0.0
      %366 = vmatprep.subr.mxu0 0.0
      %367 = vmatpush1.msra.mxu0 0.0
      %368 = vmatprep.subr.mxu0 0.0
      %369 = vmatpush1.msra.mxu0 0.0
      %370 = vmatprep.subr.mxu0 0.0
      %371 = vmatpush1.msra.mxu0 0.0
      %372 = vmatprep.subr.mxu0 0.0
      %373 = vmatpush1.msra.mxu0 0.0
      %374 = vmatprep.subr.mxu0 0.0
      %375 = vmatpush1.msra.mxu0 0.0
      %376 = vmatprep.subr.mxu0 0.0
      %377 = vmatpush1.msra.mxu0 0.0
      %378 = vmatprep.subr.mxu0 0.0
      %379 = vmatpush1.msra.mxu0 0.0
      %380 = vmatprep.subr.mxu0 0.0
      %381 = vmatpush1.msra.mxu0 0.0
      %382 = vmatprep.subr.mxu0 0.0
      %383 = vmatpush1.msra.mxu0 0.0
      %384 = vmatprep.subr.mxu0 0.0
      %385 = vmatpush1.msra.mxu0 0.0
      %386 = vmatprep.subr.mxu0 0.0
      %387 = vmatpush1.msra.mxu0 0.0
      %388 = vmatprep.mubr.f32.mxu0 0.0
      %389 = vmatmul.mubr.f32.gmra.mrb[0].mxu0 %v320
      %v390 = vpop.f32.mrb[0].mxu0
      %v391 = vadd.f32 0.0, %v390
      %v392 = vpop.f32.mrb[0].mxu0
      %393 = vdwg.mxu0
      %v394 = vadd.f32 %v305, %v391
      %395 = vadd.xlane.f32.xlu0 %v394
      %v396 = vpop.xlane.xlu0 %395
      %v397 = vmul.f32 %v394, %v394
      %398 = vadd.xlane.f32.xlu0 %v397
      %v399 = vpop.xlane.xlu0 %398
      %vm400 = vcmask 7168
      %v401 = vsel %vm400, %v396, %v399
      %vm402 = vcmask 15360
      %403 = vst.msk [vmem:[%s141] sm:$0xff] %vm402, %v401
      %p404 = scmp.lt.s32.totalorder %s13, 1
      %s405 = scalar_select %p404, %s13, 1
      %s406 = smul.addr %s405, 8
      %s407 = scalar_lea.vmem %s2, %s406
      // Predicated region
      $region29: #{position_transformer_forward.2} parent=27 // pred_check
        %p408 = pneg %p78
      $region30: #{position_transformer_forward.2} parent=27 // pred_check_branch
        %410 = sbr.rel (%p408) target = $region32
      $region31: #{position_transformer_forward.2} parent=27 // pred_region
        _
      $region32: #{position_transformer_forward.2} parent=27 // pred_fallthru
        _
    $region28: #{position_transformer_forward.2} parent=5 // pred_fallthru
      _
    %p411 = scmp.le.s32.totalorder 2, %s8
    // Predicated region
    $region33: #{position_transformer_forward.2} parent=5 // pred_check
      %p412 = pneg %p411
    $region34: #{position_transformer_forward.2} parent=5 // pred_check_branch
      %414 = sbr.rel (%p412) target = $region36
    $region35: #{position_transformer_forward.2} parent=5 // pred_region
      %s415 = ssub.s32 %s8, 2
      // Predicated region
      $region37: #{position_transformer_forward.2} parent=35 // pred_check
        %p416 = pneg %p84
      $region38: #{position_transformer_forward.2} parent=35 // pred_check_branch
        %418 = sbr.rel (%p416) target = $region40
      $region39: #{position_transformer_forward.2} parent=35 // pred_region
        %p419 = scmp.lt.s32.totalorder %s14, 1
        %s420 = scalar_select %p419, %s14, 1
        %s421 = smul.addr %s420, 8
        %s422 = scalar_lea.vmem %s2, %s421
      $region40: #{position_transformer_forward.2} parent=35 // pred_fallthru
        _
    $region36: #{position_transformer_forward.2} parent=5 // pred_fallthru
      _
  $region6: #{position_transformer_forward.2} parent=0 // loop_footer
    %s12 = sadd.s32 1, %s8
  $region7: #{position_transformer_forward.2} parent=0 // loop_footer_branch
    %7 = sbr.rel target = $region3
  $region8: #{position_transformer_forward.2} parent=0 // loop_exit
    _

// kernel: position_transformer_forward.3
$region0: #{position_transformer_forward.3}
  #allocation0 [shape = 'u32[]', space=smem, size = 0x4, offset = 0x4, fixed_abs, tag = 'smem constant byte address 0x4 - core index']
  #allocation1 [shape = 'u32[144,128]{1,0:T(1,128)}', space=vmem, size = 0x12000, scoped, tag = 'internal scratch']
  %s0 = inlined_call_operand.vmem [shape: f32[2,4,160], index: 0, kind: input, shape index: {}]
  %s1 = inlined_call_operand.vmem [shape: f32[3,8,4], index: 1, kind: input, shape index: {}]
  %s2 = inlined_call_operand.vmem [shape: f32[8,1], index: 2, kind: input, shape index: {}]
  %s3 = inlined_call_operand.vmem [shape: f32[8,1], index: 3, kind: input, shape index: {}]
  %s4 = inlined_call_operand.vmem [shape: f32[2,8,128], index: 4, kind: output, shape index: {}]
  %s5 = sld [smem:[#allocation0]]
  $region49: #{position_transformer_forward.3} parent=0
    _
  %s7 = ssub.s32 1, %s5
  %s8 = scalar_select 0, %s7, %s5
  loop: start=0, step=1, limit=4
  $region2: #{position_transformer_forward.3} parent=0 // loop_pre_header
    _
  $region3: #{position_transformer_forward.3} parent=0 // loop_header
    %s10 = sphi 0, %s14
    %p11 = scmp.ge.s32.totalorder %s10, 4
    %s20 = sphi 0, %s22
    %s23 = sphi 0, %s20
    %s24 = sphi 0, %s23
    %s40 = sphi 0, %s24
    %s44 = sphi 0, %s44
    %s46 = sphi 0, %s44
    %s47 = sphi 0, %s46
    %s61 = sphi 0, %s47
    %s65 = sphi 0, %s65
    %s67 = sphi 0, %s65
    %s68 = sphi 0, %s67
    %s82 = sphi 0, %s68
    %s86 = sphi 0, %s86
    %s88 = sphi 0, %s86
    %s89 = sphi 0, %s88
    %s103 = sphi 0, %s89
    %s109 = sphi 0, %s111
    %s112 = sphi 0, %s109
    %s113 = sphi 0, %s112
    %s129 = sphi 0, %s113
  $region4: #{position_transformer_forward.3} parent=0 // loop_header_branch
    %13 = sbr.rel (%p11) target = $region8
  $region5: #{position_transformer_forward.3} parent=0 // loop_body
    %s15 = ssub.s32 %s10, 1
    %s16 = ssub.s32 %s10, 2
    %s17 = sadd.s32 %s10, 1
    %s18 = ssub.s32 %s10, %s17
    %p19 = scmp.eq.s32.totalorder %s18, 0
    %s21 = sadd.s32 %s20, 1
    %s22 = scalar_select %p19, %s20, %s21
    %p25 = pneg %p19
    %p26 = scmp.eq.s32.totalorder %s10, 1
    %p27 = por %p25, %p26
    %p28 = scmp.ne.s32.totalorder %s20, %s23
    %p29 = scmp.eq.s32.totalorder %s10, 0
    %p30 = por %p28, %p29
    %p31 = scmp.ne.s32.totalorder %s20, %s23
    %p32 = scmp.eq.s32.totalorder %s15, 1
    %p33 = por %p31, %p32
    %p34 = scmp.ne.s32.totalorder %s23, %s24
    %p35 = scmp.eq.s32.totalorder %s15, 0
    %p36 = por %p34, %p35
    %p37 = scmp.ne.s32.totalorder %s23, %s24
    %p38 = scmp.eq.s32.totalorder %s16, 1
    %p39 = por %p37, %p38
    %p41 = scmp.ne.s32.totalorder %s24, %s40
    %p42 = scmp.eq.s32.totalorder %s16, 0
    %p43 = por %p41, %p42
    %s45 = sadd.s32 %s44, 1
    %p48 = scmp.eq.s32.totalorder %s10, 1
    %p49 = scmp.ne.s32.totalorder %s44, %s46
    %p50 = scmp.eq.s32.totalorder %s10, 0
    %p51 = por %p49, %p50
    %p52 = scmp.ne.s32.totalorder %s44, %s46
    %p53 = scmp.eq.s32.totalorder %s15, 1
    %p54 = por %p52, %p53
    %p55 = scmp.ne.s32.totalorder %s46, %s47
    %p56 = scmp.eq.s32.totalorder %s15, 0
    %p57 = por %p55, %p56
    %p58 = scmp.ne.s32.totalorder %s46, %s47
    %p59 = scmp.eq.s32.totalorder %s16, 1
    %p60 = por %p58, %p59
    %p62 = scmp.ne.s32.totalorder %s47, %s61
    %p63 = scmp.eq.s32.totalorder %s16, 0
    %p64 = por %p62, %p63
    %s66 = sadd.s32 %s65, 1
    %p69 = scmp.eq.s32.totalorder %s10, 1
    %p70 = scmp.ne.s32.totalorder %s65, %s67
    %p71 = scmp.eq.s32.totalorder %s10, 0
    %p72 = por %p70, %p71
    %p73 = scmp.ne.s32.totalorder %s65, %s67
    %p74 = scmp.eq.s32.totalorder %s15, 1
    %p75 = por %p73, %p74
    %p76 = scmp.ne.s32.totalorder %s67, %s68
    %p77 = scmp.eq.s32.totalorder %s15, 0
    %p78 = por %p76, %p77
    %p79 = scmp.ne.s32.totalorder %s67, %s68
    %p80 = scmp.eq.s32.totalorder %s16, 1
    %p81 = por %p79, %p80
    %p83 = scmp.ne.s32.totalorder %s68, %s82
    %p84 = scmp.eq.s32.totalorder %s16, 0
    %p85 = por %p83, %p84
    %s87 = sadd.s32 %s86, 1
    %p90 = scmp.eq.s32.totalorder %s10, 1
    %p91 = scmp.ne.s32.totalorder %s86, %s88
    %p92 = scmp.eq.s32.totalorder %s10, 0
    %p93 = por %p91, %p92
    %p94 = scmp.ne.s32.totalorder %s86, %s88
    %p95 = scmp.eq.s32.totalorder %s15, 1
    %p96 = por %p94, %p95
    %p97 = scmp.ne.s32.totalorder %s88, %s89
    %p98 = scmp.eq.s32.totalorder %s15, 0
    %p99 = por %p97, %p98
    %p100 = scmp.ne.s32.totalorder %s88, %s89
    %p101 = scmp.eq.s32.totalorder %s16, 1
    %p102 = por %p100, %p101
    %p104 = scmp.ne.s32.totalorder %s89, %s103
    %p105 = scmp.eq.s32.totalorder %s16, 0
    %p106 = por %p104, %p105
    %s107 = ssub.s32 %s10, %s17
    %p108 = scmp.eq.s32.totalorder %s107, 0
    %s110 = sadd.s32 %s109, 1
    %s111 = scalar_select %p108, %s109, %s110
    %p114 = pneg %p108
    %p115 = scmp.eq.s32.totalorder %s10, 1
    %p116 = por %p114, %p115
    %p117 = scmp.ne.s32.totalorder %s109, %s112
    %p118 = scmp.eq.s32.totalorder %s10, 0
    %p119 = por %p117, %p118
    %p120 = scmp.ne.s32.totalorder %s109, %s112
    %p121 = scmp.eq.s32.totalorder %s15, 1
    %p122 = por %p120, %p121
    %p123 = scmp.ne.s32.totalorder %s112, %s113
    %p124 = scmp.eq.s32.totalorder %s15, 0
    %p125 = por %p123, %p124
    %p126 = scmp.ne.s32.totalorder %s112, %s113
    %p127 = scmp.eq.s32.totalorder %s16, 1
    %p128 = por %p126, %p127
    %p130 = scmp.ne.s32.totalorder %s113, %s129
    %p131 = scmp.eq.s32.totalorder %s16, 0
    %p132 = por %p130, %p131
    %p133 = scmp.le.s32.totalorder 1, %s10
    %p134 = scmp.lt.s32.totalorder %s10, 3
    %p135 = pnand %p133, %p134
    %p136 = pneg %p135
    // Predicated region
    $region9: #{position_transformer_forward.3} parent=5 // pred_check
      _
    $region10: #{position_transformer_forward.3} parent=5 // pred_check_branch
      %138 = sbr.rel (%p135) target = $region12
    $region11: #{position_transformer_forward.3} parent=5 // pred_region
      %s139 = ssub.s32 %s10, 1
      // Predicated region
      $region13: #{position_transformer_forward.3} parent=11 // pred_check
        %p140 = pneg %p57
      $region14: #{position_transformer_forward.3} parent=11 // pred_check_branch
        %142 = sbr.rel (%p140) target = $region16
      $region15: #{position_transformer_forward.3} parent=11 // pred_region
        _
      $region16: #{position_transformer_forward.3} parent=11 // pred_fallthru
        _
      // Predicated region
      $region17: #{position_transformer_forward.3} parent=11 // pred_check
        %p143 = pneg %p78
      $region18: #{position_transformer_forward.3} parent=11 // pred_check_branch
        %145 = sbr.rel (%p143) target = $region20
      $region19: #{position_transformer_forward.3} parent=11 // pred_region
        _
      $region20: #{position_transformer_forward.3} parent=11 // pred_fallthru
        _
      // Predicated region
      $region21: #{position_transformer_forward.3} parent=11 // pred_check
        %p146 = pneg %p99
      $region22: #{position_transformer_forward.3} parent=11 // pred_check_branch
        %148 = sbr.rel (%p146) target = $region24
      $region23: #{position_transformer_forward.3} parent=11 // pred_region
        _
      $region24: #{position_transformer_forward.3} parent=11 // pred_fallthru
        _
    $region12: #{position_transformer_forward.3} parent=5 // pred_fallthru
      _
    %p149 = scmp.lt.s32.totalorder %s10, 2
    // Predicated region
    $region25: #{position_transformer_forward.3} parent=5 // pred_check
      %p150 = pneg %p149
    $region26: #{position_transformer_forward.3} parent=5 // pred_check_branch
      %152 = sbr.rel (%p150) target = $region28
    $region27: #{position_transformer_forward.3} parent=5 // pred_region
      // Predicated region
      $region29: #{position_transformer_forward.3} parent=27 // pred_check
        %p153 = pneg %p30
      $region30: #{position_transformer_forward.3} parent=27 // pred_check_branch
        %155 = sbr.rel (%p153) target = $region32
      $region31: #{position_transformer_forward.3} parent=27 // pred_region
        %p156 = scmp.lt.s32.totalorder %s10, 1
        %s157 = scalar_select %p156, %s10, 1
        %s158 = smul.addr %s157, 2
        %s159 = smul.addr %s158, 4
        %s160 = scalar_lea.vmem %s0, %s159
      $region32: #{position_transformer_forward.3} parent=27 // pred_fallthru
        _
    $region28: #{position_transformer_forward.3} parent=5 // pred_fallthru
      _
    %p161 = scmp.le.s32.totalorder 1, %s10
    %p162 = scmp.lt.s32.totalorder %s10, 3
    %p163 = pnand %p161, %p162
    %p164 = pneg %p163
    // Predicated region
    $region33: #{position_transformer_forward.3} parent=5 // pred_check
      _
    $region34: #{position_transformer_forward.3} parent=5 // pred_check_branch
      %166 = sbr.rel (%p163) target = $region36
    $region35: #{position_transformer_forward.3} parent=5 // pred_region
      %s167 = ssub.s32 %s10, 1
      %p168 = scmp.lt.s32.totalorder %s15, 1
      %s169 = scalar_select %p168, %s15, 1
      %s170 = smul.addr %s169, 2
      %s171 = smul.addr %s170, 4
      %s172 = scalar_lea.vmem %s0, %s171
      %p173 = pneg %p36
      %p174 = pneg %p33
      %p175 = pneg %p57
      %p176 = pneg %p54
      %p177 = pneg %p78
      %p178 = pneg %p75
      %p179 = pneg %p99
      %p180 = pneg %p96
      %p181 = pneg %p125
      %p182 = pneg %p122
      %p183 = scmp.lt.s32.totalorder %s15, 1
      %s184 = scalar_select %p183, %s15, 1
      %s185 = smul.addr %s184, 8
      %s186 = scalar_lea.vmem %s4, %s185
      %p187 = scmp.lt.s32.totalorder %s15, 1
      %s188 = scalar_select %p187, %s15, 1
      %s189 = smul.addr %s188, 2
      %s190 = smul.addr %s189, 4
      %s191 = scalar_lea.vmem %s0, %s190
      %p192 = scmp.lt.s32.totalorder %s15, 1
      %s193 = scalar_select %p192, %s15, 1
      %s194 = smul.addr %s193, 8
      %s195 = scalar_lea.vmem %s4, %s194
      %v196 = vld [vmem:[%s2] sm:$0xff]
      %v197 = vld [vmem:[%s3] sm:$0xff]
      %v198 = vld [vmem:[%s191] sm:$0xf]
      %v199 = vld [vmem:[%s1] sm:$0xff]
      %v200 = vld [vmem:[%s191] sm:$0xff]
      %s201 = scalar_lea.vmem %s1, 8
      %v202 = vld [vmem:[%s201] sm:$0xff]
      %v204 = vcombine.high %v200, %v200
      %205 = vrot.lane.b32.xlu0 %v200, 112
      %v206 = vpop.permute.xlu0 %205
      %207 = vrot.lane.b32.xlu0 %v204, 112
      %v208 = vpop.permute.xlu0 %207
      %vm209 = vcmask 916480
      %v210 = vsel %vm209, %v206, %v208
      %vm211 = vcmask 31744
      %v213 = vsel %vm211, %v202, 0
      %vm215 = vcmask 1043456
      %v216 = vsel %vm215, %v210, 0
      %218 = vmatprep.subr.mxu0 0.0
      %219 = vmatpush1.msra.mxu0 %v216
      %220 = vmatprep.subr.mxu0 0.0
      %221 = vmatpush1.msra.mxu0 0.0
      %222 = vmatprep.subr.mxu0 0.0
      %223 = vmatpush1.msra.mxu0 0.0
      %224 = vmatprep.subr.mxu0 0.0
      %225 = vmatpush1.msra.mxu0 0.0
      %226 = vmatprep.subr.mxu0 0.0
      %227 = vmatpush1.msra.mxu0 0.0
      %228 = vmatprep.subr.mxu0 0.0
      %229 = vmatpush1.msra.mxu0 0.0
      %230 = vmatprep.subr.mxu0 0.0
      %231 = vmatpush1.msra.mxu0 0.0
      %232 = vmatprep.subr.mxu0 0.0
      %233 = vmatpush1.msra.mxu0 0.0
      %234 = vmatprep.subr.mxu0 0.0
      %235 = vmatpush1.msra.mxu0 0.0
      %236 = vmatprep.subr.mxu0 0.0
      %237 = vmatpush1.msra.mxu0 0.0
      %238 = vmatprep.subr.mxu0 0.0
      %239 = vmatpush1.msra.mxu0 0.0
      %240 = vmatprep.subr.mxu0 0.0
      %241 = vmatpush1.msra.mxu0 0.0
      %242 = vmatprep.subr.mxu0 0.0
      %243 = vmatpush1.msra.mxu0 0.0
      %244 = vmatprep.subr.mxu0 0.0
      %245 = vmatpush1.msra.mxu0 0.0
      %246 = vmatprep.subr.mxu0 0.0
      %247 = vmatpush1.msra.mxu0 0.0
      %248 = vmatprep.subr.mxu0 0.0
      %249 = vmatpush1.msra.mxu0 0.0
      %250 = vmatprep.subr.mxu0 0.0
      %251 = vmatpush1.msra.mxu0 0.0
      %252 = vmatprep.subr.mxu0 0.0
      %253 = vmatpush1.msra.mxu0 0.0
      %254 = vmatprep.subr.mxu0 0.0
      %255 = vmatpush1.msra.mxu0 0.0
      %256 = vmatprep.subr.mxu0 0.0
      %257 = vmatpush1.msra.mxu0 0.0
      %258 = vmatprep.subr.mxu0 0.0
      %259 = vmatpush1.msra.mxu0 0.0
      %260 = vmatprep.subr.mxu0 0.0
      %261 = vmatpush1.msra.mxu0 0.0
      %262 = vmatprep.subr.mxu0 0.0
      %263 = vmatpush1.msra.mxu0 0.0
      %264 = vmatprep.subr.mxu0 0.0
      %265 = vmatpush1.msra.mxu0 0.0
      %266 = vmatprep.subr.mxu0 0.0
      %267 = vmatpush1.msra.mxu0 0.0
      %268 = vmatprep.subr.mxu0 0.0
      %269 = vmatpush1.msra.mxu0 0.0
      %270 = vmatprep.subr.mxu0 0.0
      %271 = vmatpush1.msra.mxu0 0.0
      %272 = vmatprep.subr.mxu0 0.0
      %273 = vmatpush1.msra.mxu0 0.0
      %274 = vmatprep.subr.mxu0 0.0
      %275 = vmatpush1.msra.mxu0 0.0
      %276 = vmatprep.subr.mxu0 0.0
      %277 = vmatpush1.msra.mxu0 0.0
      %278 = vmatprep.subr.mxu0 0.0
      %279 = vmatpush1.msra.mxu0 0.0
      %280 = vmatprep.subr.mxu0 0.0
      %281 = vmatpush1.msra.mxu0 0.0
      %282 = vmatprep.mubr.f32.mxu0 0.0
      %283 = vmatmul.mubr.f32.gmra.mrb[0].mxu0 %v213
      %v284 = vpop.f32.mrb[0].mxu0
      %v285 = vadd.f32 0.0, %v284
      %v286 = vpop.f32.mrb[0].mxu0
      %287 = vdwg.mxu0
      %v289 = vsel %vm211, %v199, 0
      %v292 = vsel %vm215, %v198, 0
      %294 = vmatprep.subr.mxu0 0.0
      %295 = vmatpush1.msra.mxu0 %v292
      %296 = vmatprep.subr.mxu0 0.0
      %297 = vmatpush1.msra.mxu0 0.0
      %298 = vmatprep.subr.mxu0 0.0
      %299 = vmatpush1.msra.mxu0 0.0
      %300 = vmatprep.subr.mxu0 0.0
      %301 = vmatpush1.msra.mxu0 0.0
      %302 = vmatprep.subr.mxu0 0.0
      %303 = vmatpush1.msra.mxu0 0.0
      %304 = vmatprep.subr.mxu0 0.0
      %305 = vmatpush1.msra.mxu0 0.0
      %306 = vmatprep.subr.mxu0 0.0
      %307 = vmatpush1.msra.mxu0 0.0
      %308 = vmatprep.subr.mxu0 0.0
      %309 = vmatpush1.msra.mxu0 0.0
      %310 = vmatprep.subr.mxu0 0.0
      %311 = vmatpush1.msra.mxu0 0.0
      %312 = vmatprep.subr.mxu0 0.0
      %313 = vmatpush1.msra.mxu0 0.0
      %314 = vmatprep.subr.mxu0 0.0
      %315 = vmatpush1.msra.mxu0 0.0
      %316 = vmatprep.subr.mxu0 0.0
      %317 = vmatpush1.msra.mxu0 0.0
      %318 = vmatprep.subr.mxu0 0.0
      %319 = vmatpush1.msra.mxu0 0.0
      %320 = vmatprep.subr.mxu0 0.0
      %321 = vmatpush1.msra.mxu0 0.0
      %322 = vmatprep.subr.mxu0 0.0
      %323 = vmatpush1.msra.mxu0 0.0
      %324 = vmatprep.subr.mxu0 0.0
      %325 = vmatpush1.msra.mxu0 0.0
      %326 = vmatprep.subr.mxu0 0.0
      %327 = vmatpush1.msra.mxu0 0.0
      %328 = vmatprep.subr.mxu0 0.0
      %329 = vmatpush1.msra.mxu0 0.0
      %330 = vmatprep.subr.mxu0 0.0
      %331 = vmatpush1.msra.mxu0 0.0
      %332 = vmatprep.subr.mxu0 0.0
      %333 = vmatpush1.msra.mxu0 0.0
      %334 = vmatprep.subr.mxu0 0.0
      %335 = vmatpush1.msra.mxu0 0.0
      %336 = vmatprep.subr.mxu0 0.0
      %337 = vmatpush1.msra.mxu0 0.0
      %338 = vmatprep.subr.mxu0 0.0
      %339 = vmatpush1.msra.mxu0 0.0
      %340 = vmatprep.subr.mxu0 0.0
      %341 = vmatpush1.msra.mxu0 0.0
      %342 = vmatprep.subr.mxu0 0.0
      %343 = vmatpush1.msra.mxu0 0.0
      %344 = vmatprep.subr.mxu0 0.0
      %345 = vmatpush1.msra.mxu0 0.0
      %346 = vmatprep.subr.mxu0 0.0
      %347 = vmatpush1.msra.mxu0 0.0
      %348 = vmatprep.subr.mxu0 0.0
      %349 = vmatpush1.msra.mxu0 0.0
      %350 = vmatprep.subr.mxu0 0.0
      %351 = vmatpush1.msra.mxu0 0.0
      %352 = vmatprep.subr.mxu0 0.0
      %353 = vmatpush1.msra.mxu0 0.0
      %354 = vmatprep.subr.mxu0 0.0
      %355 = vmatpush1.msra.mxu0 0.0
      %356 = vmatprep.subr.mxu0 0.0
      %357 = vmatpush1.msra.mxu0 0.0
      %358 = vmatprep.mubr.f32.mxu0 0.0
      %359 = vmatmul.mubr.f32.gmra.mrb[0].mxu0 %v289
      %v360 = vpop.f32.mrb[0].mxu0
      %v361 = vadd.f32 %v285, %v360
      %v362 = vpop.f32.mrb[0].mxu0
      %363 = vdwg.mxu0
      %v364 = vld [vmem:[%s191] sm:$0xff]
      %s365 = scalar_lea.vmem %s1, 16
      %v366 = vld [vmem:[%s365] sm:$0xff]
      %v368 = vcombine.high %v364, %v364
      %369 = vrot.lane.b32.xlu0 %v364, 96
      %v370 = vpop.permute.xlu0 %369
      %371 = vrot.lane.b32.xlu0 %v368, 96
      %v372 = vpop.permute.xlu0 %371
      %vm373 = vcmask 785408
      %v374 = vsel %vm373, %v370, %v372
      %v376 = vsel %vm211, %v366, 0
      %v378 = vsel %vm215, %v374, 0
      %380 = vmatprep.subr.mxu0 0.0
      %381 = vmatpush1.msra.mxu0 %v378
      %382 = vmatprep.subr.mxu0 0.0
      %383 = vmatpush1.msra.mxu0 0.0
      %384 = vmatprep.subr.mxu0 0.0
      %385 = vmatpush1.msra.mxu0 0.0
      %386 = vmatprep.subr.mxu0 0.0
      %387 = vmatpush1.msra.mxu0 0.0
      %388 = vmatprep.subr.mxu0 0.0
      %389 = vmatpush1.msra.mxu0 0.0
      %390 = vmatprep.subr.mxu0 0.0
      %391 = vmatpush1.msra.mxu0 0.0
      %392 = vmatprep.subr.mxu0 0.0
      %393 = vmatpush1.msra.mxu0 0.0
      %394 = vmatprep.subr.mxu0 0.0
      %395 = vmatpush1.msra.mxu0 0.0
      %396 = vmatprep.subr.mxu0 0.0
      %397 = vmatpush1.msra.mxu0 0.0
      %398 = vmatprep.subr.mxu0 0.0
      %399 = vmatpush1.msra.mxu0 0.0
      %400 = vmatprep.subr.mxu0 0.0
      %401 = vmatpush1.msra.mxu0 0.0
      %402 = vmatprep.subr.mxu0 0.0
      %403 = vmatpush1.msra.mxu0 0.0
      %404 = vmatprep.subr.mxu0 0.0
      %405 = vmatpush1.msra.mxu0 0.0
      %406 = vmatprep.subr.mxu0 0.0
      %407 = vmatpush1.msra.mxu0 0.0
      %408 = vmatprep.subr.mxu0 0.0
      %409 = vmatpush1.msra.mxu0 0.0
      %410 = vmatprep.subr.mxu0 0.0
      %411 = vmatpush1.msra.mxu0 0.0
      %412 = vmatprep.subr.mxu0 0.0
      %413 = vmatpush1.msra.mxu0 0.0
      %414 = vmatprep.subr.mxu0 0.0
      %415 = vmatpush1.msra.mxu0 0.0
      %416 = vmatprep.subr.mxu0 0.0
      %417 = vmatpush1.msra.mxu0 0.0
      %418 = vmatprep.subr.mxu0 0.0
      %419 = vmatpush1.msra.mxu0 0.0
      %420 = vmatprep.subr.mxu0 0.0
      %421 = vmatpush1.msra.mxu0 0.0
      %422 = vmatprep.subr.mxu0 0.0
      %423 = vmatpush1.msra.mxu0 0.0
      %424 = vmatprep.subr.mxu0 0.0
      %425 = vmatpush1.msra.mxu0 0.0
      %426 = vmatprep.subr.mxu0 0.0
      %427 = vmatpush1.msra.mxu0 0.0
      %428 = vmatprep.subr.mxu0 0.0
      %429 = vmatpush1.msra.mxu0 0.0
      %430 = vmatprep.subr.mxu0 0.0
      %431 = vmatpush1.msra.mxu0 0.0
      %432 = vmatprep.subr.mxu0 0.0
      %433 = vmatpush1.msra.mxu0 0.0
      %434 = vmatprep.subr.mxu0 0.0
      %435 = vmatpush1.msra.mxu0 0.0
      %436 = vmatprep.subr.mxu0 0.0
      %437 = vmatpush1.msra.mxu0 0.0
      %438 = vmatprep.subr.mxu0 0.0
      %439 = vmatpush1.msra.mxu0 0.0
      %440 = vmatprep.subr.mxu0 0.0
      %441 = vmatpush1.msra.mxu0 0.0
      %442 = vmatprep.subr.mxu0 0.0
      %443 = vmatpush1.msra.mxu0 0.0
      %444 = vmatprep.mubr.f32.mxu0 0.0
      %445 = vmatmul.mubr.f32.gmra.mrb[0].mxu0 %v376
      %v446 = vpop.f32.mrb[0].mxu0
      %v447 = vadd.f32 0.0, %v446
      %v448 = vpop.f32.mrb[0].mxu0
      %449 = vdwg.mxu0
      %v450 = vadd.f32 %v361, %v447
      %452 = vset.pattern.permute.xlu0 0
      %453 = vperm.xlu0 %452, %v196
      %v454 = vpop.permute.xlu0 %453
      %v456 = vmul.f32 %v450, %v454
      %458 = vset.pattern.permute.xlu0 0
      %459 = vperm.xlu0 %458, %v197
      %v460 = vpop.permute.xlu0 %459
      %v462 = vadd.f32 %v456, %v460
      %v463 = vmax.f32 %v462, 0.0
      %464 = vst [vmem:[%s195] sm:$0xff] %v463
      %p465 = scmp.lt.s32.totalorder %s15, 1
      %s466 = scalar_select %p465, %s15, 1
      %s467 = smul.addr %s466, 8
      %s468 = scalar_lea.vmem %s4, %s467
      // Predicated region
      $region37: #{position_transformer_forward.3} parent=35 // pred_check
        %p469 = pneg %p122
      $region38: #{position_transformer_forward.3} parent=35 // pred_check_branch
        %471 = sbr.rel (%p469) target = $region40
      $region39: #{position_transformer_forward.3} parent=35 // pred_region
        _
      $region40: #{position_transformer_forward.3} parent=35 // pred_fallthru
        _
    $region36: #{position_transformer_forward.3} parent=5 // pred_fallthru
      _
    %p472 = scmp.le.s32.totalorder 2, %s10
    // Predicated region
    $region41: #{position_transformer_forward.3} parent=5 // pred_check
      %p473 = pneg %p472
    $region42: #{position_transformer_forward.3} parent=5 // pred_check_branch
      %475 = sbr.rel (%p473) target = $region44
    $region43: #{position_transformer_forward.3} parent=5 // pred_region
      %s476 = ssub.s32 %s10, 2
      // Predicated region
      $region45: #{position_transformer_forward.3} parent=43 // pred_check
        %p477 = pneg %p128
      $region46: #{position_transformer_forward.3} parent=43 // pred_check_branch
        %479 = sbr.rel (%p477) target = $region48
      $region47: #{position_transformer_forward.3} parent=43 // pred_region
        %p480 = scmp.lt.s32.totalorder %s16, 1
        %s481 = scalar_select %p480, %s16, 1
        %s482 = smul.addr %s481, 8
        %s483 = scalar_lea.vmem %s4, %s482
      $region48: #{position_transformer_forward.3} parent=43 // pred_fallthru
        _
    $region44: #{position_transformer_forward.3} parent=5 // pred_fallthru
      _
  $region6: #{position_transformer_forward.3} parent=0 // loop_footer
    %s14 = sadd.s32 1, %s10
  $region7: #{position_transformer_forward.3} parent=0 // loop_footer_branch
    %9 = sbr.rel target = $region3
  $region8: #{position_transformer_forward.3} parent=0 // loop_exit
    _

</llo_original>
